<compile_context>
chip_gen: v7x
topology: tpu7x:2x2x1
jax: 0.10.0
libtpu: 0.0.40
codegen_flags: <defaults>
</compile_context>

<pallas_src>
import collections
import functools

import jax
import jax.numpy as jnp
from jax import lax
from jax.experimental import pallas as pl
from jax.experimental.pallas import tpu as pltpu

_DEFAULT_TK = 8192          # requested k-tile cap (lanes); the plan may shrink it


# --------------------------------------------------------------------------
# Planning helpers
# --------------------------------------------------------------------------
def _cdiv(a, b):
    return -(-a // b)


def _round_up(v, mult):
    return _cdiv(v, mult) * mult


def _vmem_capacity_bytes():
    """Physical VMEM of the current chip; conservative fallback if unknown."""
    try:
        return int(pltpu.get_tpu_info().vmem_capacity_bytes)
    except Exception:
        return 64 * 1024 * 1024          # v7x-sized -> safe on every generation


def _num_tensorcores():
    """TensorCores per chip (v7x == 2); 1 if it cannot be determined."""
    try:
        info = pltpu.get_tpu_info()
        for attr in ("num_cores", "core_count", "num_tensorcores",
                     "tensorcore_count"):
            v = getattr(info, attr, None)
            if v:
                return max(1, min(2, int(v)))
    except Exception:
        pass
    return 1


_Plan = collections.namedtuple(
    "_Plan", "m k mp kp tk steps_per_split n_split stream_dtype footprint cap")


def _make_plan(x_shape, x_dtype, compute_dtype, tk_req, n_split):
    b, c, h, w = x_shape
    m, k = b * c, h * w
    cdt = jnp.dtype(compute_dtype)
    row_mult = 16 if cdt.itemsize < 4 else 8     # bf16 packs 2 rows per sublane
    mp = _round_up(max(m, row_mult), row_mult)
    kp0 = _round_up(k, 128)

    cap = _vmem_capacity_bytes()
    budget = max(16 << 20, min(cap // 2, 48 << 20))   # per-generation working budget

    # If no zero padding is needed we stream the caller's dtype straight from
    # HBM (no wrapper pad/cast staging pass) and cast in-kernel.
    maybe_unpadded = (mp == m) and (kp0 == k)
    stream_dtype = jnp.dtype(x_dtype) if maybe_unpadded else cdt
    itemsize = stream_dtype.itemsize

    # Resident VMEM: f32 accumulator/output (double-buffered bound) + slack.
    resident = 2 * mp * mp * 4 + (1 << 20)
    tk_budget = max(128, (budget - resident) // (2 * mp * itemsize))
    tk_max = max(128, (min(int(tk_req), int(tk_budget)) // 128) * 128)

    # Spread the 128-aligned contraction dim evenly over the minimal number of
    # k-steps (a multiple of n_split); prefer an exact tiling of kp0 so no
    # zero columns are streamed.
    q = kp0 // 128
    steps = n_split * _cdiv(_cdiv(q, n_split), tk_max // 128)
    exact = None
    if maybe_unpadded:
        s = steps
        while s <= min(q, 2 * steps):
            if q % s == 0:
                exact = s
                break
            s += n_split
    if exact is not None:
        steps = exact
        tk = (q // steps) * 128
        kp = kp0
    else:
        tk = _round_up(_cdiv(kp0, steps), 128)
        kp = steps * tk
        if (mp, kp) != (m, k):
            stream_dtype = cdt               # staging pad -> fuse the bf16 cast there

    footprint = 2 * mp * tk * jnp.dtype(stream_dtype).itemsize + resident
    return _Plan(m, k, mp, kp, tk, steps // n_split, n_split,
                 jnp.dtype(stream_dtype), footprint, cap)


def _compiler_params(plan, semantics):
    limit = int(min(max(plan.footprint + (8 << 20), 32 << 20),
                    max(32 << 20, plan.cap * 3 // 4)))
    return pltpu.CompilerParams(dimension_semantics=semantics,
                                vmem_limit_bytes=limit)


def _prep_features(x, plan):
    """NCHW -> (mp, kp) feature matrix; avoids a staging pass when possible."""
    feats = x.reshape(plan.m, plan.k)
    if (plan.mp, plan.kp) == (plan.m, plan.k):
        if feats.dtype != plan.stream_dtype:
            feats = feats.astype(plan.stream_dtype)
        return feats
    feats = feats.astype(plan.stream_dtype)
    return jnp.pad(feats, ((0, plan.mp - plan.m), (0, plan.kp - plan.k)))


# --------------------------------------------------------------------------
# Kernels
# --------------------------------------------------------------------------
def _gram_kernel(f_ref, g_ref, *, inv_norm, compute_dtype):
    """Partial Gram, accumulated straight into the resident output block."""
    ki = pl.program_id(1)

    @pl.when(ki == 0)
    def _init():
        g_ref[...] = jnp.zeros_like(g_ref)

    f = f_ref[...].astype(compute_dtype)
    # F_tile @ F_tile^T via a contraction of both last dims (no transpose).
    g_ref[...] += lax.dot_general(
        f, f, dimension_numbers=(((1,), (1,)), ((), ())),
        preferred_element_type=jnp.float32)

    @pl.when(ki == pl.num_programs(1) - 1)
    def _finalize():
        g_ref[...] *= inv_norm


def _gram_mse_kernel(f_ref, t_hbm, loss_ref, acc_ref, t_vmem, t_sem, *,
                     inv_norm, inv_numel, compute_dtype):
    """Fused Gram + MSE: only the scalar loss is written back."""
    ki = pl.program_id(0)

    @pl.when(ki == 0)
    def _init():
        acc_ref[...] = jnp.zeros_like(acc_ref)
        # Single-buffered target: one manual DMA issued up front, awaited at the
        # finalize step -> hidden under the whole k reduction.
        pltpu.make_async_copy(t_hbm, t_vmem, t_sem.at[0]).start()

    f = f_ref[...].astype(compute_dtype)
    acc_ref[...] += lax.dot_general(
        f, f, dimension_numbers=(((1,), (1,)), ((), ())),
        preferred_element_type=jnp.float32)

    @pl.when(ki == pl.num_programs(0) - 1)
    def _finalize():
        pltpu.make_async_copy(t_hbm, t_vmem, t_sem.at[0]).wait()
        d = acc_ref[...] * inv_norm - t_vmem[...]
        loss_ref[0, 0] = jnp.sum(d * d) * inv_numel


# --------------------------------------------------------------------------
# Wrappers
# --------------------------------------------------------------------------
def _gram_partials_call(feats, plan, inv_norm, compute_dtype):
    sps = plan.steps_per_split
    kernel = functools.partial(_gram_kernel, inv_norm=inv_norm,
                               compute_dtype=jnp.dtype(compute_dtype))
    return pl.pallas_call(
        kernel,
        out_shape=jax.ShapeDtypeStruct((plan.n_split, plan.mp, plan.mp),
                                       jnp.float32),
        grid=(plan.n_split, sps),
        in_specs=[pl.BlockSpec((plan.mp, plan.tk),
                               lambda ci, ki: (0, ci * sps + ki))],
        out_specs=pl.BlockSpec((None, plan.mp, plan.mp),
                               lambda ci, ki: (ci, 0, 0)),
        compiler_params=_compiler_params(plan, ("parallel", "arbitrary")),
    )(feats)


def gram_matrix(x, *, compute_dtype=jnp.bfloat16, tk=_DEFAULT_TK,
                num_k_splits=None):
    """Gram matrix matching the PyTorch static method: (B*C, B*C) f32."""
    n_split = max(1, _num_tensorcores() if num_k_splits is None
                  else int(num_k_splits))
    plan = _make_plan(x.shape, x.dtype, compute_dtype, tk, n_split)
    feats = _prep_features(x, plan)
    inv_norm = 1.0 / float(plan.m * plan.k)
    partials = _gram_partials_call(feats, plan, inv_norm, compute_dtype)
    g = partials[0] if plan.n_split == 1 else jnp.sum(partials, axis=0)
    return g[:plan.m, :plan.m]


def style_loss(x, target, *, compute_dtype=jnp.bfloat16, tk=_DEFAULT_TK,
               num_k_splits=None):
    """MSE(Gram(x), target); target is the real-size (B*C, B*C) f32 Gram."""
    n_split = max(1, _num_tensorcores() if num_k_splits is None
                  else int(num_k_splits))
    plan = _make_plan(x.shape, x.dtype, compute_dtype, tk, n_split)
    if target.shape != (plan.m, plan.m):
        raise ValueError(f"target Gram shape {target.shape} does not match "
                         f"({plan.m}, {plan.m}) implied by x")
    target = target.astype(jnp.float32)
    feats = _prep_features(x, plan)
    inv_norm = 1.0 / float(plan.m * plan.k)
    inv_numel = 1.0 / float(plan.m * plan.m)

    if n_split > 1:
        # v7x dual-TensorCore path: each core reduces half of k into its own
        # partial Gram; a tiny XLA epilogue combines them and takes the MSE.
        partials = _gram_partials_call(feats, plan, inv_norm, compute_dtype)
        g = jnp.sum(partials, axis=0)[:plan.m, :plan.m]
        d = g - target
        return jnp.mean(d * d)

    # Single-core fully fused path: only the scalar loss leaves the kernel,
    # the target Gram is single-buffered via one manual DMA.
    target_padded = jnp.pad(target, ((0, plan.mp - plan.m),
                                     (0, plan.mp - plan.m)))
    kernel = functools.partial(_gram_mse_kernel, inv_norm=inv_norm,
                               inv_numel=inv_numel,
                               compute_dtype=jnp.dtype(compute_dtype))
    loss = pl.pallas_call(
        kernel,
        out_shape=jax.ShapeDtypeStruct((1, 1), jnp.float32),
        grid=(plan.steps_per_split,),
        in_specs=[pl.BlockSpec((plan.mp, plan.tk), lambda ki: (0, ki)),
                  pl.BlockSpec(memory_space=pl.ANY)],          # target stays in HBM
        out_specs=pl.BlockSpec((1, 1), lambda ki: (0, 0)),
        scratch_shapes=[pltpu.VMEM((plan.mp, plan.mp), jnp.float32),   # accumulator
                        pltpu.VMEM((plan.mp, plan.mp), jnp.float32),   # target copy
                        pltpu.SemaphoreType.DMA((1,))],
        compiler_params=_compiler_params(plan, ("arbitrary",)),
    )(feats, target_padded)
    return loss[0, 0]


class StyleLoss:
    """JAX/Pallas port of the PyTorch StyleLoss module.

    __call__(x) returns x unchanged (identity forward) and stores the scalar
    style loss (MSE between Gram(x) and the target Gram) in ``self.loss``.
    """

    def __init__(self, target_feature, *, compute_dtype=jnp.bfloat16,
                 tk=_DEFAULT_TK, num_k_splits=None):
        self._compute_dtype = compute_dtype
        self._tk = tk
        self._num_k_splits = num_k_splits
        # Target Gram is a constant ("detached"); stored at its real size and
        # zero-padded internally by the fused loss kernel when needed.
        self.target = gram_matrix(target_feature, compute_dtype=compute_dtype,
                                  tk=tk, num_k_splits=num_k_splits)
        self.loss = None

    def __call__(self, x):
        self.loss = style_loss(x, self.target,
                               compute_dtype=self._compute_dtype,
                               tk=self._tk, num_k_splits=self._num_k_splits)
        return x  # forward is identity on x; loss stored as a side value

    forward = __call__


# --------------------------------------------------------------------------
# Self-test
# --------------------------------------------------------------------------
if __name__ == "__main__":
    key = jax.random.PRNGKey(0)
    k1, k2 = jax.random.split(key)

    B, C, H, W = 2, 4, 16, 16            # NCHW, small synthetic shapes
    target_feature = jax.random.normal(k1, (B, C, H, W), dtype=jnp.float32)
    x = jax.random.normal(k2, (B, C, H, W), dtype=jnp.float32)

    def ref_gram(feat, qdtype):
        b, c, h, w = feat.shape
        f = feat.reshape(b * c, h * w).astype(qdtype).astype(jnp.float32)
        g = jnp.matmul(f, f.T, precision=lax.Precision.HIGHEST)
        return g / float(b * c * h * w)

    g_x_q = ref_gram(x, jnp.bfloat16)
    g_t_q = ref_gram(target_feature, jnp.bfloat16)
    loss_ref_q = jnp.mean((g_x_q - g_t_q) ** 2)
    loss_ref_f32 = jnp.mean(
        (ref_gram(x, jnp.float32) - ref_gram(target_feature, jnp.float32)) ** 2)

    # Module (auto split-count; tk=128 exercises multi-step k accumulation).
    module = StyleLoss(target_feature, tk=128)
    out = jax.block_until_ready(module(x))
    loss = jax.block_until_ready(module.loss)
    assert jnp.allclose(out, x), "forward must return x unchanged"
    assert jnp.allclose(loss, loss_ref_q, rtol=1e-3, atol=1e-6), (loss, loss_ref_q)
    assert jnp.allclose(loss, loss_ref_f32, rtol=1e-1, atol=1e-5), (loss, loss_ref_f32)

    target_real = module.target          # real-size (B*C, B*C) f32 Gram

    # Fused single-core path, multi-step accumulation + manual target DMA.
    loss_fused = jax.block_until_ready(
        style_loss(x, target_real, tk=128, num_k_splits=1))
    assert jnp.allclose(loss_fused, loss_ref_q, rtol=1e-3, atol=1e-6)

    # Fused path with the default (large) tile -> single k step.
    loss_big = jax.block_until_ready(style_loss(x, target_real, num_k_splits=1))
    assert jnp.allclose(loss_big, loss_fused, rtol=1e-4, atol=1e-7)

    # Two-way k split (v7x dual-core path; correct on single-core chips too).
    loss_split = jax.block_until_ready(
        style_loss(x, target_real, tk=128, num_k_splits=2))
    assert jnp.allclose(loss_split, loss_fused, rtol=1e-4, atol=1e-7)

    # Standalone Gram kernel (accumulates straight into the output block).
    g_kernel = jax.block_until_ready(gram_matrix(x, tk=128, num_k_splits=1))
    assert g_kernel.shape == (B * C, B * C)
    assert jnp.allclose(g_kernel, g_x_q, rtol=1e-3, atol=1e-5), "gram mismatch"

    # f32 compute path (no feature quantization, no pad/cast staging pass).
    g_f32 = jax.block_until_ready(
        gram_matrix(x, compute_dtype=jnp.float32, num_k_splits=1))
    assert jnp.allclose(g_f32, ref_gram(x, jnp.float32), rtol=2e-4, atol=1e-6)

    print("KERNEL_OK")
</pallas_src>

<mosaic_0001>
module attributes {stable_mosaic.version = 11 : i64} {
  func.func @_gram_kernel(%arg0: i32, %arg1: i32, %arg2: memref<16x128xbf16, #tpu.memory_space<vmem>>, %arg3: memref<1x16x16xf32, #tpu.memory_space<vmem>>) attributes {dimension_semantics = [#tpu.dimension_semantics<parallel>, #tpu.dimension_semantics<arbitrary>], iteration_bounds = array<i64: 1, 2>, scalar_prefetch = 0 : i64, scratch_operands = 0 : i64, tpu.core_type = #tpu.core_type<tc>, window_params = [{transform_indices = @transform_0, window_bounds = array<i64: 16, 128>}, {transform_indices = @transform_1, window_bounds = array<i64: 1, 16, 16>}]} {
    %c0_i32 = arith.constant 0 : i32
    %0 = arith.cmpi eq, %arg1, %c0_i32 : i32
    %1 = arith.extui %0 : i1 to i32
    %c0_i32_0 = arith.constant 0 : i32
    %2 = arith.cmpi ne, %1, %c0_i32_0 : i32
    scf.if %2 {
      %cst_9 = arith.constant 0.000000e+00 : f32
      %14 = vector.broadcast %cst_9 : f32 to vector<16x16xf32>
      %c0_10 = arith.constant 0 : index
      %c0_11 = arith.constant 0 : index
      %c0_12 = arith.constant 0 : index
      %15 = vector.load %arg3[%c0_10, %c0_11, %c0_12] : memref<1x16x16xf32, #tpu.memory_space<vmem>>, vector<1x16x16xf32>
      %16 = vector.shape_cast %15 : vector<1x16x16xf32> to vector<16x16xf32>
      %17 = vector.shape_cast %14 : vector<16x16xf32> to vector<1x16x16xf32>
      tpu.vector_store %arg3[%c0_10, %c0_11, %c0_12], %17 {strides = array<i32>} : memref<1x16x16xf32, #tpu.memory_space<vmem>>, vector<1x16x16xf32>,
    } else {
    }
    %c0 = arith.constant 0 : index
    %c0_1 = arith.constant 0 : index
    %3 = vector.load %arg2[%c0, %c0_1] : memref<16x128xbf16, #tpu.memory_space<vmem>>, vector<16x128xbf16>
    %c0_2 = arith.constant 0 : index
    %c0_3 = arith.constant 0 : index
    %c0_4 = arith.constant 0 : index
    %4 = vector.load %arg3[%c0_2, %c0_3, %c0_4] : memref<1x16x16xf32, #tpu.memory_space<vmem>>, vector<1x16x16xf32>
    %5 = vector.shape_cast %4 : vector<1x16x16xf32> to vector<16x16xf32>
    %cst = arith.constant dense<0.000000e+00> : vector<16x16xf32>
    %6 = tpu.matmul %3, %3, %cst {dimension_numbers = #tpu.dot_dimension_numbers<[1], [1], [0], [0], [0, 0, 1, 0], [], []>} : vector<16x128xbf16>, vector<16x128xbf16>, vector<16x16xf32> -> vector<16x16xf32>
    %7 = arith.addf %5, %6 : vector<16x16xf32>
    %c0_5 = arith.constant 0 : index
    %c0_6 = arith.constant 0 : index
    %c0_7 = arith.constant 0 : index
    %8 = vector.load %arg3[%c0_5, %c0_6, %c0_7] : memref<1x16x16xf32, #tpu.memory_space<vmem>>, vector<1x16x16xf32>
    %9 = vector.shape_cast %8 : vector<1x16x16xf32> to vector<16x16xf32>
    %10 = vector.shape_cast %7 : vector<16x16xf32> to vector<1x16x16xf32>
    tpu.vector_store %arg3[%c0_5, %c0_6, %c0_7], %10 {strides = array<i32>} : memref<1x16x16xf32, #tpu.memory_space<vmem>>, vector<1x16x16xf32>,
    %c1_i32 = arith.constant 1 : i32
    %11 = arith.cmpi eq, %arg1, %c1_i32 : i32
    %12 = arith.extui %11 : i1 to i32
    %c0_i32_8 = arith.constant 0 : i32
    %13 = arith.cmpi ne, %12, %c0_i32_8 : i32
    scf.if %13 {
      %c0_9 = arith.constant 0 : index
      %c0_10 = arith.constant 0 : index
      %c0_11 = arith.constant 0 : index
      %14 = vector.load %arg3[%c0_9, %c0_10, %c0_11] : memref<1x16x16xf32, #tpu.memory_space<vmem>>, vector<1x16x16xf32>
      %15 = vector.shape_cast %14 : vector<1x16x16xf32> to vector<16x16xf32>
      %cst_12 = arith.constant 4.8828125E-4 : f32
      %16 = vector.broadcast %cst_12 : f32 to vector<16x16xf32>
      %17 = arith.mulf %15, %16 : vector<16x16xf32>
      %c0_13 = arith.constant 0 : index
      %c0_14 = arith.constant 0 : index
      %c0_15 = arith.constant 0 : index
      %18 = vector.load %arg3[%c0_13, %c0_14, %c0_15] : memref<1x16x16xf32, #tpu.memory_space<vmem>>, vector<1x16x16xf32>
      %19 = vector.shape_cast %18 : vector<1x16x16xf32> to vector<16x16xf32>
      %20 = vector.shape_cast %17 : vector<16x16xf32> to vector<1x16x16xf32>
      tpu.vector_store %arg3[%c0_13, %c0_14, %c0_15], %20 {strides = array<i32>} : memref<1x16x16xf32, #tpu.memory_space<vmem>>, vector<1x16x16xf32>,
    } else {
    }
    return
  }
  func.func @transform_0(%arg0: i32, %arg1: i32) -> (i32, i32) {
    %c2_i32 = arith.constant 2 : i32
    %0 = arith.muli %arg0, %c2_i32 : i32
    %1 = arith.addi %0, %arg1 : i32
    %c0_i32 = arith.constant 0 : i32
    %c0_i32_0 = arith.constant 0 : i32
    return %c0_i32, %1 : i32, i32
  }
  func.func @transform_1(%arg0: i32, %arg1: i32) -> (i32, i32, i32) {
    %c0_i32 = arith.constant 0 : i32
    %c0_i32_0 = arith.constant 0 : i32
    %c0_i32_1 = arith.constant 0 : i32
    return %arg0, %c0_i32, %c0_i32_0 : i32, i32, i32
  }
}

</mosaic_0001>

<llo_original>
// kernel: tpu_custom_call.1
$region0: #{tpu_custom_call.1}
  #allocation0 [shape = 'u32[]', space=smem, size = 0x4, offset = 0x4, fixed_abs, tag = 'smem constant byte address 0x4 - core index']
  #allocation1 [shape = 'u32[144,128]{1,0:T(1,128)}', space=vmem, size = 0x12000, scoped, tag = 'internal scratch']
  %s0 = inlined_call_operand.hbm [shape: bf16[16,256], index: 0, kind: input, shape index: {}]
  %s1 = inlined_call_operand.hbm [shape: f32[1,16,16], index: 1, kind: output, shape index: {}]
  %s2 = sld [smem:[#allocation0]]
  $region49: #{tpu_custom_call.1} parent=0
    _
  %s4 = ssub.s32 1, %s2
  %s5 = scalar_select 0, %s4, %s2
  $region1: #{tpu_custom_call.1} parent=0
    #allocation2 [shape = 'u8[8192]{0}', space=vmem, size = 0x2000, scoped, tag = 'input window, operand 0']
    #allocation3 [shape = 's32[2]{0}', space=sflag, size = 0x8, scoped, tag = 'scoped memory for tpu_custom_call.1']
    #allocation4 [shape = 's32[2]{0}', space=sflag, size = 0x8, scoped, tag = 'scoped memory for tpu_custom_call.1']
    #allocation5 [shape = 'u8[8192]{0}', space=vmem, size = 0x2000, scoped, tag = 'output window, operand 0, single buffered']
    %6 = vsyncpa [#allocation3], 0
    %s7 = scalar_lea.sflag [#allocation3], 1
    %8 = vsyncpa %s7, 0
    %9 = vsyncpa [#allocation4], 0
    loop: start=0, step=1, limit=4
    $region2: #{tpu_custom_call.1} parent=1 // loop_pre_header
      _
    $region3: #{tpu_custom_call.1} parent=1 // loop_header
      %s11 = sphi 0, %s15
      %p12 = scmp.ge.s32.totalorder %s11, 4
      %s18 = sphi 0, %s30
      %s19 = sphi 0, %s26
      %s20 = sphi 0, %s18
      %s21 = sphi 0, %s19
      %s22 = sphi 0, %s20
      %s23 = sphi 0, %s21
      %s37 = sphi 0, %s39
      %s40 = sphi 0, %s37
      %s41 = sphi 0, %s40
      %s57 = sphi 0, %s41
      %s63 = sphi 0, %s65
      %s66 = sphi 0, %s63
      %s67 = sphi 0, %s66
      %s83 = sphi 0, %s67
    $region4: #{tpu_custom_call.1} parent=1 // loop_header_branch
      %14 = sbr.rel (%p12) target = $region8
    $region5: #{tpu_custom_call.1} parent=1 // loop_body
      %s16 = ssub.s32 %s11, 1
      %s17 = ssub.s32 %s11, 2
      %s24 = sadd.s32 1, %s19
      %p25 = scmp.ge.s32.totalorder %s24, 2
      %s26 = scalar_select %p25, 0, %s24
      %s27 = sadd.s32 1, %s18
      %s28 = scalar_select %p25, %s27, %s18
      %p29 = scmp.ge.s32.totalorder %s28, 1
      %s30 = scalar_select %p29, 0, %s28
      %s31 = smul.u32 %s18, 2
      %s32 = sadd.s32 %s31, %s19
      %s33 = smul.u32 %s30, 2
      %s34 = sadd.s32 %s33, %s26
      %s35 = ssub.s32 %s32, %s34
      %p36 = scmp.eq.s32.totalorder %s35, 0
      %s38 = sadd.s32 %s37, 1
      %s39 = scalar_select %p36, %s37, %s38
      %p42 = pneg %p36
      %p43 = scmp.eq.s32.totalorder %s11, 1
      %p44 = por %p42, %p43
      %p45 = scmp.ne.s32.totalorder %s37, %s40
      %p46 = scmp.eq.s32.totalorder %s11, 0
      %p47 = por %p45, %p46
      %p48 = scmp.ne.s32.totalorder %s37, %s40
      %p49 = scmp.eq.s32.totalorder %s16, 1
      %p50 = por %p48, %p49
      %p51 = scmp.ne.s32.totalorder %s40, %s41
      %p52 = scmp.eq.s32.totalorder %s16, 0
      %p53 = por %p51, %p52
      %p54 = scmp.ne.s32.totalorder %s40, %s41
      %p55 = scmp.eq.s32.totalorder %s17, 1
      %p56 = por %p54, %p55
      %p58 = scmp.ne.s32.totalorder %s41, %s57
      %p59 = scmp.eq.s32.totalorder %s17, 0
      %p60 = por %p58, %p59
      %s61 = ssub.s32 %s18, %s30
      %p62 = scmp.eq.s32.totalorder %s61, 0
      %s64 = sadd.s32 %s63, 1
      %s65 = scalar_select %p62, %s63, %s64
      %p68 = pneg %p62
      %p69 = scmp.eq.s32.totalorder %s11, 1
      %p70 = por %p68, %p69
      %p71 = scmp.ne.s32.totalorder %s63, %s66
      %p72 = scmp.eq.s32.totalorder %s11, 0
      %p73 = por %p71, %p72
      %p74 = scmp.ne.s32.totalorder %s63, %s66
      %p75 = scmp.eq.s32.totalorder %s16, 1
      %p76 = por %p74, %p75
      %p77 = scmp.ne.s32.totalorder %s66, %s67
      %p78 = scmp.eq.s32.totalorder %s16, 0
      %p79 = por %p77, %p78
      %p80 = scmp.ne.s32.totalorder %s66, %s67
      %p81 = scmp.eq.s32.totalorder %s17, 1
      %p82 = por %p80, %p81
      %p84 = scmp.ne.s32.totalorder %s67, %s83
      %p85 = scmp.eq.s32.totalorder %s17, 0
      %p86 = por %p84, %p85
      %p87 = scmp.le.s32.totalorder 1, %s11
      %p88 = scmp.lt.s32.totalorder %s11, 3
      %p89 = pnand %p87, %p88
      %p90 = pneg %p89
      // Predicated region
      $region9: #{tpu_custom_call.1} parent=5 // pred_check
        _
      $region10: #{tpu_custom_call.1} parent=5 // pred_check_branch
        %92 = sbr.rel (%p89) target = $region12
      $region11: #{tpu_custom_call.1} parent=5 // pred_region
        %s93 = ssub.s32 %s11, 1
      $region12: #{tpu_custom_call.1} parent=5 // pred_fallthru
        _
      %p94 = scmp.lt.s32.totalorder %s11, 2
      // Predicated region
      $region13: #{tpu_custom_call.1} parent=5 // pred_check
        %p95 = pneg %p94
      $region14: #{tpu_custom_call.1} parent=5 // pred_check_branch
        %97 = sbr.rel (%p95) target = $region16
      $region15: #{tpu_custom_call.1} parent=5 // pred_region
        // Predicated region
        $region17: #{tpu_custom_call.1} parent=15 // pred_check
          %p98 = pneg %p47
        $region18: #{tpu_custom_call.1} parent=15 // pred_check_branch
          %100 = sbr.rel (%p98) target = $region20
        $region19: #{tpu_custom_call.1} parent=15 // pred_region
          %s101 = sand.u32 %s37, 1
          %s102 = scalar_lea.sflag [#allocation3], %s101
          %s103 = sand.u32 %s37, 1
          %s104 = smul.addr %s103, 8
          %s105 = scalar_lea.vmem [#allocation2], %s104
          %s106 = smul.u32 %s18, 2
          %s107 = sadd.s32 %s106, %s19
          %s109 = ssub.s32 128, 128
          %110 = vsyncadd %s102, %s109
          %s111 = smul.addr %s107, 64
          %s112 = scalar_lea.hbm %s0, %s111
          %s113 = sshll.u32 %s105, 4
          %s114 = int_to_ptr.vmem [resolvable:$true] %s113
          %119 = dma.hbm_to_vmem [thread:$0]  %s112, 128, %s114, %s102, 128, 64, 4
        $region20: #{tpu_custom_call.1} parent=15 // pred_fallthru
          _
      $region16: #{tpu_custom_call.1} parent=5 // pred_fallthru
        _
      %p120 = scmp.le.s32.totalorder 1, %s11
      %p121 = scmp.lt.s32.totalorder %s11, 3
      %p122 = pnand %p120, %p121
      %p123 = pneg %p122
      // Predicated region
      $region21: #{tpu_custom_call.1} parent=5 // pred_check
        _
      $region22: #{tpu_custom_call.1} parent=5 // pred_check_branch
        %125 = sbr.rel (%p122) target = $region24
      $region23: #{tpu_custom_call.1} parent=5 // pred_region
        %s126 = ssub.s32 %s11, 1
        %s127 = sand.u32 %s40, 1
        %s128 = scalar_lea.sflag [#allocation3], %s127
        %s129 = sand.u32 %s40, 1
        %s130 = smul.addr %s129, 8
        %s131 = scalar_lea.vmem [#allocation2], %s130
        // Predicated region
        $region25: #{tpu_custom_call.1} parent=23 // pred_check
          %p132 = pneg %p53
        $region26: #{tpu_custom_call.1} parent=23 // pred_check_branch
          %134 = sbr.rel (%p132) target = $region28
        $region27: #{tpu_custom_call.1} parent=23 // pred_region
          %135 = dma.done %s128, 128
        $region28: #{tpu_custom_call.1} parent=23 // pred_fallthru
          _
        %s136 = sand.u32 %s40, 1
        %s137 = scalar_lea.sflag [#allocation3], %s136
        %s138 = sand.u32 %s40, 1
        %s139 = smul.addr %s138, 8
        %s140 = scalar_lea.vmem [#allocation2], %s139
        %p141 = pneg %p53
        %p142 = pneg %p50
        %p143 = pneg %p79
        %p144 = pneg %p76
        %s145 = smul.u32 %s20, 2
        %s146 = sadd.s32 %s145, %s21
        %p148 = scmp.eq.s32.totalorder %s21, 0
        // Predicated region
        $region29: #{tpu_custom_call.1} parent=23 // pred_check
          %p149 = pneg %p148
        $region30: #{tpu_custom_call.1} parent=23 // pred_check_branch
          %151 = sbr.rel (%p149) target = $region32
        $region31: #{tpu_custom_call.1} parent=23 // pred_region
          %vm152 = vcmask 130048
          %153 = vst.msk [vmem:[#allocation5] sm:$0xff] %vm152, 0.0
          %154 = vst.msk [vmem:[#allocation5 + $0x8] sm:$0xff] %vm152, 0.0
        $region32: #{tpu_custom_call.1} parent=23 // pred_fallthru
          _
        %v155 = vld [vmem:[%s131] sm:$0xf]
        %v156 = vld [vmem:[%s131 + $0x4] sm:$0xf]
        %v157 = vld [vmem:[#allocation5] sm:$0xff]
        %v158 = vld [vmem:[#allocation5 + $0x8] sm:$0xff]
        %v161 = vunpack.c.l.b16 %v155
        %v162 = vunpack.c.l.b16 %v156
        %v163 = vpack.c.b16 %v162, %v161
        %165 = vmatprep.subr.bf16.mxu0 0
        %166 = vmatpush1.bf16.xpose.msra.mxu0 %v163
        %167 = vmatprep.subr.bf16.mxu0 0
        %168 = vmatpush1.bf16.xpose.msra.mxu0 0
        %169 = vmatprep.subr.bf16.mxu0 0
        %170 = vmatpush1.bf16.xpose.msra.mxu0 0
        %171 = vmatprep.subr.bf16.mxu0 0
        %172 = vmatpush1.bf16.xpose.msra.mxu0 0
        %173 = vmatprep.subr.bf16.mxu0 0
        %174 = vmatpush1.bf16.xpose.msra.mxu0 0
        %175 = vmatprep.subr.bf16.mxu0 0
        %176 = vmatpush1.bf16.xpose.msra.mxu0 0
        %177 = vmatprep.subr.bf16.mxu0 0
        %178 = vmatpush1.bf16.xpose.msra.mxu0 0
        %179 = vmatprep.subr.bf16.mxu0 0
        %180 = vmatpush1.bf16.xpose.msra.mxu0 0
        %181 = vmatprep.subr.bf16.mxu0 0
        %182 = vmatpush1.bf16.xpose.msra.mxu0 0
        %183 = vmatprep.subr.bf16.mxu0 0
        %184 = vmatpush1.bf16.xpose.msra.mxu0 0
        %185 = vmatprep.subr.bf16.mxu0 0
        %186 = vmatpush1.bf16.xpose.msra.mxu0 0
        %187 = vmatprep.subr.bf16.mxu0 0
        %188 = vmatpush1.bf16.xpose.msra.mxu0 0
        %189 = vmatprep.subr.bf16.mxu0 0
        %190 = vmatpush1.bf16.xpose.msra.mxu0 0
        %191 = vmatprep.subr.bf16.mxu0 0
        %192 = vmatpush1.bf16.xpose.msra.mxu0 0
        %193 = vmatprep.subr.bf16.mxu0 0
        %194 = vmatpush1.bf16.xpose.msra.mxu0 0
        %195 = vmatprep.subr.bf16.mxu0 0
        %196 = vmatpush1.bf16.xpose.msra.mxu0 0
        %197 = vmatprep.mubr.bf16.mxu0 0
        %198 = vmatmul.mubr.bf16.gmra.mrb[0].mxu0 %v163
        %v199 = vpop.f32.mrb[0].mxu0
        %v200 = vadd.f32 0.0, %v199
        %v201 = vpop.f32.mrb[0].mxu0
        %v202 = vpop.f32.mrb[0].mxu0
        %v203 = vadd.f32 0.0, %v202
        %v204 = vpop.f32.mrb[0].mxu0
        %205 = vdwg.mxu0
        %v206 = vadd.f32 %v157, %v200
        %v207 = vadd.f32 %v158, %v203
        %vm208 = vcmask 130048
        %209 = vst.msk [vmem:[#allocation5] sm:$0xff] %vm208, %v206
        %210 = vst.msk [vmem:[#allocation5 + $0x8] sm:$0xff] %vm208, %v207
        %p211 = scmp.eq.s32.totalorder %s21, 1
        // Predicated region
        $region33: #{tpu_custom_call.1} parent=23 // pred_check
          %p212 = pneg %p211
        $region34: #{tpu_custom_call.1} parent=23 // pred_check_branch
          %214 = sbr.rel (%p212) target = $region36
        $region35: #{tpu_custom_call.1} parent=23 // pred_region
          %v215 = vld [vmem:[#allocation5] sm:$0xff]
          %v216 = vld [vmem:[#allocation5 + $0x8] sm:$0xff]
          %v217 = vmul.f32 %v215, 0.00048828125
          %v218 = vmul.f32 %v216, 0.00048828125
          %219 = vst.msk [vmem:[#allocation5] sm:$0xff] %vm208, %v217
          %220 = vst.msk [vmem:[#allocation5 + $0x8] sm:$0xff] %vm208, %v218
        $region36: #{tpu_custom_call.1} parent=23 // pred_fallthru
          _
        // Predicated region
        $region37: #{tpu_custom_call.1} parent=23 // pred_check
          %p221 = pneg %p76
        $region38: #{tpu_custom_call.1} parent=23 // pred_check_branch
          %223 = sbr.rel (%p221) target = $region40
        $region39: #{tpu_custom_call.1} parent=23 // pred_region
          %s225 = ssub.s32 256, 256
          %226 = vsyncadd [#allocation4], %s225
          %s227 = smul.addr %s20, 2
          %s228 = smul.addr %s227, 128
          %s229 = scalar_lea.hbm %s1, %s228
          %s230 = sshll.u32 [#allocation5], 4
          %s231 = int_to_ptr.vmem [resolvable:$true] %s230
          %236 = dma.vmem_to_hbm [thread:$0]  %s231, 256, %s229, [#allocation4], 128, 128, 8
        $region40: #{tpu_custom_call.1} parent=23 // pred_fallthru
          _
        // Predicated region
        $region41: #{tpu_custom_call.1} parent=23 // pred_check
          %p237 = pneg %p76
        $region42: #{tpu_custom_call.1} parent=23 // pred_check_branch
          %239 = sbr.rel (%p237) target = $region44
        $region43: #{tpu_custom_call.1} parent=23 // pred_region
          %240 = dma.done [#allocation4], 256
        $region44: #{tpu_custom_call.1} parent=23 // pred_fallthru
          _
      $region24: #{tpu_custom_call.1} parent=5 // pred_fallthru
        _
      %p241 = scmp.le.s32.totalorder 2, %s11
      // Predicated region
      $region45: #{tpu_custom_call.1} parent=5 // pred_check
        %p242 = pneg %p241
      $region46: #{tpu_custom_call.1} parent=5 // pred_check_branch
        %244 = sbr.rel (%p242) target = $region48
      $region47: #{tpu_custom_call.1} parent=5 // pred_region
        %s245 = ssub.s32 %s11, 2
      $region48: #{tpu_custom_call.1} parent=5 // pred_fallthru
        _
    $region6: #{tpu_custom_call.1} parent=1 // loop_footer
      %s15 = sadd.s32 1, %s11
    $region7: #{tpu_custom_call.1} parent=1 // loop_footer_branch
      %10 = sbr.rel target = $region3
    $region8: #{tpu_custom_call.1} parent=1 // loop_exit
      _
    %246 = vsyncpa [#allocation3], 1
    %s247 = scalar_lea.sflag [#allocation3], 1
    %248 = vsyncpa %s247, 1
    %249 = vsyncpa [#allocation4], 1
    %s250 = scalar_lea.sflag [#allocation4], 1
    %251 = vsyncpa %s250, 1

</llo_original>
